<compile_context>
chip_gen: v7x
topology: tpu7x:2x2x1
jax: 0.10.0
libtpu: 0.0.40
codegen_flags: <defaults>
</compile_context>

<pallas_src>
import functools

import jax
import jax.numpy as jnp
from jax.experimental import pallas as pl
from jax.experimental.pallas import tpu as pltpu


def _round_up(x, m):
    return (x + m - 1) // m * m


def lora_linear_kernel(x_ref, wt_ref, b_ref, at_ref, bt_ref, o_ref,
                       acc_ref, lora_acc_ref):
    # x_ref       : (tm, tk)      VMEM   activation row tile
    # wt_ref      : (tk, tn)      VMEM   frozen weight tile (transposed)
    # b_ref       : (1,  tn)      VMEM   frozen bias tile (f32)
    # at_ref      : (tk, rank)    VMEM   lora_a tile (transposed)
    # bt_ref      : (rank, tn)    VMEM   lora_b tile (transposed, pre-scaled)
    # o_ref       : (tm, tn)      VMEM   output tile
    # acc_ref     : (tm, tn)   f32 VMEM scratch (frozen GEMM + bias accumulator)
    # lora_acc_ref: (tm, rank) f32 VMEM scratch (x @ A^T, carried across j)
    j = pl.program_id(1)
    k = pl.program_id(2)

    @pl.when(k == 0)
    def _init_acc():
        # Fuse the bias add into accumulator init (broadcast over rows):
        # saves a full-tile VPU pass in the epilogue.
        acc_ref[...] = jnp.broadcast_to(b_ref[...].astype(jnp.float32),
                                        acc_ref.shape)

    @pl.when((j == 0) & (k == 0))
    def _init_lora():
        lora_acc_ref[...] = jnp.zeros_like(lora_acc_ref)

    x = x_ref[...]
    # Frozen GEMM partial sum over this K tile (f32 MXU accumulation).
    acc_ref[...] += jnp.dot(x, wt_ref[...], preferred_element_type=jnp.float32)

    # LoRA A-path partial sum: only on the first N tile; the result is carried
    # in VMEM scratch and reused for every other j of the same row block.
    @pl.when(j == 0)
    def _lora_a():
        lora_acc_ref[...] += jnp.dot(x, at_ref[...],
                                     preferred_element_type=jnp.float32)

    @pl.when(k == pl.num_programs(2) - 1)
    def _finalize():
        # B^T is pre-scaled by alpha/rank on the host -> no per-tile scale mul.
        # Cast of the mid result to bt dtype only loses precision for bf16
        # weights (documented, acceptable for serving).
        lora = jnp.dot(lora_acc_ref[...].astype(bt_ref.dtype), bt_ref[...],
                       preferred_element_type=jnp.float32)
        o_ref[...] = (acc_ref[...] + lora).astype(o_ref.dtype)


def lora_linear(x, w, b, lora_a, lora_b, *, alpha, rank,
                tm=256, tn=256, tk=512, compute_dtype=None):
    """x: (..., in_dim); w: (out_dim, in_dim); b: (out_dim,) or None;
    lora_a: (rank, in_dim); lora_b: (out_dim, rank).

    compute_dtype: optionally cast x / weights (e.g. jnp.bfloat16) for the
    bf16 MXU path on v6e/v7x; accumulation stays f32.
    """
    in_dim = x.shape[-1]
    out_dim = w.shape[0]
    lead = x.shape[:-1]
    x2 = x.reshape(-1, in_dim)
    M = x2.shape[0]

    if b is None:
        b = jnp.zeros((out_dim,), dtype=jnp.float32)

    # Clamp tiles for small problems while keeping (8, 128) alignment.
    tm = min(tm, _round_up(M, 8))
    tn = min(tn, _round_up(out_dim, 128))
    tk = min(tk, _round_up(in_dim, 128))

    Mp = _round_up(M, tm)
    Np = _round_up(out_dim, tn)   # lane-dense output (multiple of 128)
    Kp = _round_up(in_dim, tk)

    # Fold the LoRA scale into B^T once on the host (O(rank * out_dim)).
    scale = float(alpha) / float(rank)
    bt = lora_b.T * scale                                  # (rank, out_dim)

    # Zero-pad to tile multiples; zero K/N padding contributes nothing and the
    # extra rows/cols are sliced off after the call.
    x2p = jnp.pad(x2, ((0, Mp - M), (0, Kp - in_dim)))
    wt = jnp.pad(w.T, ((0, Kp - in_dim), (0, Np - out_dim)))
    b2 = jnp.pad(b.reshape(1, out_dim).astype(jnp.float32),
                 ((0, 0), (0, Np - out_dim)))
    at = jnp.pad(lora_a.T, ((0, Kp - in_dim), (0, 0)))
    btp = jnp.pad(bt, ((0, 0), (0, Np - out_dim)))

    if compute_dtype is not None:
        x2p = x2p.astype(compute_dtype)
        wt = wt.astype(compute_dtype)
        at = at.astype(compute_dtype)
        btp = btp.astype(compute_dtype)

    grid = (Mp // tm, Np // tn, Kp // tk)

    out = pl.pallas_call(
        lora_linear_kernel,
        out_shape=jax.ShapeDtypeStruct((Mp, Np), x.dtype),
        grid_spec=pltpu.PrefetchScalarGridSpec(
            num_scalar_prefetch=0,
            grid=grid,
            in_specs=[
                pl.BlockSpec((tm, tk), lambda i, j, k: (i, k)),     # x rows
                pl.BlockSpec((tk, tn), lambda i, j, k: (k, j)),     # W^T tile
                pl.BlockSpec((1, tn), lambda i, j, k: (0, j)),      # bias tile
                pl.BlockSpec((tk, rank), lambda i, j, k: (k, 0)),   # A^T tile
                pl.BlockSpec((rank, tn), lambda i, j, k: (0, j)),   # B^T tile
            ],
            out_specs=pl.BlockSpec((tm, tn), lambda i, j, k: (i, j)),
            scratch_shapes=[
                pltpu.VMEM((tm, tn), jnp.float32),    # frozen + bias accumulator
                pltpu.VMEM((tm, rank), jnp.float32),  # LoRA mid (carried over j)
            ],
        ),
        compiler_params=pltpu.CompilerParams(
            # N ("j") must be sequential so the LoRA mid scratch computed at
            # j == 0 is valid for all later N tiles of the same row block.
            dimension_semantics=("parallel", "arbitrary", "arbitrary"),
            # Explicit budget: default tiles use only a few MiB, and 48 MiB
            # stays safely under v7x's 64 MiB physical VMEM.
            vmem_limit_bytes=48 * 1024 * 1024,
        ),
    )(x2p, wt, b2, at, btp)

    return out[:M, :out_dim].reshape(*lead, out_dim)


def lora_linear_ref(x, w, b, lora_a, lora_b, *, alpha, rank):
    frozen = jnp.einsum("...i,oi->...o", x, w) + b
    lora = jnp.einsum("...r,or->...o",
                      jnp.einsum("...i,ri->...r", x, lora_a), lora_b)
    return frozen + (alpha / rank) * lora


if __name__ == "__main__":
    # Small shapes consistent with the module's forward.
    batch, seq, in_dim, out_dim = 2, 8, 32, 64
    rank, alpha = 8, 16.0

    key = jax.random.PRNGKey(0)
    kx, kw, kb, ka, kbb, kx2, kx3, kw3, kb3, ka3, kbb3 = jax.random.split(key, 11)

    x = jax.random.normal(kx, (batch, seq, in_dim), dtype=jnp.float32)

    # Deterministic parameter init mirroring nn.Linear / reset_parameters():
    #   nn.Linear default: kaiming_uniform(a=sqrt(5)) -> U(-1/sqrt(in), 1/sqrt(in))
    #   lora_a: same kaiming_uniform bound; lora_b: zeros.
    bound = 1.0 / (in_dim ** 0.5)
    w = jax.random.uniform(kw, (out_dim, in_dim), minval=-bound, maxval=bound,
                           dtype=jnp.float32)
    b = jax.random.uniform(kb, (out_dim,), minval=-bound, maxval=bound,
                           dtype=jnp.float32)
    lora_a = jax.random.uniform(ka, (rank, in_dim), minval=-bound, maxval=bound,
                                dtype=jnp.float32)
    lora_b = jnp.zeros((out_dim, rank), dtype=jnp.float32)  # per reset_parameters()

    # TODO(synk): dropout is identity here (p=0.0 / eval mode); a training-mode
    # dropout would need the pltpu PRNG path.
    y = jax.block_until_ready(
        lora_linear(x, w, b, lora_a, lora_b, alpha=alpha, rank=rank))
    y_ref = lora_linear_ref(x, w, b, lora_a, lora_b, alpha=alpha, rank=rank)
    assert y.shape == (batch, seq, out_dim)
    assert jnp.allclose(y, y_ref, atol=1e-4, rtol=1e-4), "mismatch vs reference"

    # Second check: non-zero lora_b (exercises the LoRA branch + folded scale)
    # and non-aligned M (exercises row/col padding + lane-dense output pad).
    lora_b_nz = jax.random.uniform(kbb, (out_dim, rank), minval=-0.5, maxval=0.5,
                                   dtype=jnp.float32)
    x_odd = jax.random.normal(kx2, (3, 5, in_dim), dtype=jnp.float32)
    y2 = jax.block_until_ready(
        lora_linear(x_odd, w, b, lora_a, lora_b_nz, alpha=alpha, rank=rank))
    y2_ref = lora_linear_ref(x_odd, w, b, lora_a, lora_b_nz,
                             alpha=alpha, rank=rank)
    assert y2.shape == (3, 5, out_dim)
    assert jnp.allclose(y2, y2_ref, atol=1e-4, rtol=1e-4), "mismatch (lora path)"

    # Third check: multi-tile grid (several i, j, k tiles) to exercise the
    # carried LoRA-mid scratch across N tiles and the K-loop accumulator.
    in3, out3, M3a, M3b = 640, 384, 3, 100       # -> grid (3, 3, 3) at 128/128/256
    bound3 = 1.0 / (in3 ** 0.5)
    x3 = jax.random.normal(kx3, (M3a, M3b, in3), dtype=jnp.float32)
    w3 = jax.random.uniform(kw3, (out3, in3), minval=-bound3, maxval=bound3,
                            dtype=jnp.float32)
    b3 = jax.random.uniform(kb3, (out3,), minval=-bound3, maxval=bound3,
                            dtype=jnp.float32)
    a3 = jax.random.uniform(ka3, (rank, in3), minval=-bound3, maxval=bound3,
                            dtype=jnp.float32)
    bb3 = jax.random.uniform(kbb3, (out3, rank), minval=-0.5, maxval=0.5,
                             dtype=jnp.float32)
    y3 = jax.block_until_ready(
        lora_linear(x3, w3, b3, a3, bb3, alpha=alpha, rank=rank,
                    tm=128, tn=128, tk=256))
    y3_ref = lora_linear_ref(x3, w3, b3, a3, bb3, alpha=alpha, rank=rank)
    assert y3.shape == (M3a, M3b, out3)
    assert jnp.allclose(y3, y3_ref, atol=1e-3, rtol=1e-3), "mismatch (multi-tile)"

    print("KERNEL_OK")
</pallas_src>

<mosaic_0001>
module attributes {stable_mosaic.version = 11 : i64} {
  func.func @lora_linear_kernel(%arg0: i32, %arg1: i32, %arg2: i32, %arg3: memref<16x128xf32, #tpu.memory_space<vmem>>, %arg4: memref<128x128xf32, #tpu.memory_space<vmem>>, %arg5: memref<1x128xf32, #tpu.memory_space<vmem>>, %arg6: memref<128x8xf32, #tpu.memory_space<vmem>>, %arg7: memref<8x128xf32, #tpu.memory_space<vmem>>, %arg8: memref<16x128xf32, #tpu.memory_space<vmem>>, %arg9: memref<16x128xf32, #tpu.memory_space<vmem>>, %arg10: memref<16x8xf32, #tpu.memory_space<vmem>>) attributes {dimension_semantics = [#tpu.dimension_semantics<parallel>, #tpu.dimension_semantics<arbitrary>, #tpu.dimension_semantics<arbitrary>], iteration_bounds = array<i64: 1, 1, 1>, scalar_prefetch = 0 : i64, scratch_operands = 2 : i64, tpu.core_type = #tpu.core_type<tc>, window_params = [{transform_indices = @transform_0, window_bounds = array<i64: 16, 128>}, {transform_indices = @transform_1, window_bounds = array<i64: 128, 128>}, {transform_indices = @transform_2, window_bounds = array<i64: 1, 128>}, {transform_indices = @transform_3, window_bounds = array<i64: 128, 8>}, {transform_indices = @transform_4, window_bounds = array<i64: 8, 128>}, {transform_indices = @transform_5, window_bounds = array<i64: 16, 128>}]} {
    %c0_i32 = arith.constant 0 : i32
    %0 = arith.cmpi eq, %arg2, %c0_i32 : i32
    %1 = arith.extui %0 : i1 to i32
    %c0_i32_0 = arith.constant 0 : i32
    %2 = arith.cmpi ne, %1, %c0_i32_0 : i32
    scf.if %2 {
      %c0_15 = arith.constant 0 : index
      %c0_16 = arith.constant 0 : index
      %20 = vector.load %arg5[%c0_15, %c0_16] : memref<1x128xf32, #tpu.memory_space<vmem>>, vector<1x128xf32>
      %21 = vector.shape_cast %20 : vector<1x128xf32> to vector<1x128xf32>
      %22 = vector.broadcast %21 : vector<1x128xf32> to vector<16x128xf32>
      %c0_17 = arith.constant 0 : index
      %c0_18 = arith.constant 0 : index
      %23 = vector.load %arg9[%c0_17, %c0_18] : memref<16x128xf32, #tpu.memory_space<vmem>>, vector<16x128xf32>
      tpu.vector_store %arg9[%c0_17, %c0_18], %22 {strides = array<i32>} : memref<16x128xf32, #tpu.memory_space<vmem>>, vector<16x128xf32>,
    } else {
    }
    %c0_i32_1 = arith.constant 0 : i32
    %3 = arith.cmpi eq, %arg1, %c0_i32_1 : i32
    %c0_i32_2 = arith.constant 0 : i32
    %4 = arith.cmpi eq, %arg2, %c0_i32_2 : i32
    %5 = arith.andi %3, %4 : i1
    %6 = arith.extui %5 : i1 to i32
    %c0_i32_3 = arith.constant 0 : i32
    %7 = arith.cmpi ne, %6, %c0_i32_3 : i32
    scf.if %7 {
      %cst_15 = arith.constant 0.000000e+00 : f32
      %20 = vector.broadcast %cst_15 : f32 to vector<16x8xf32>
      %c0_16 = arith.constant 0 : index
      %c0_17 = arith.constant 0 : index
      %21 = vector.load %arg10[%c0_16, %c0_17] : memref<16x8xf32, #tpu.memory_space<vmem>>, vector<16x8xf32>
      tpu.vector_store %arg10[%c0_16, %c0_17], %20 {strides = array<i32>} : memref<16x8xf32, #tpu.memory_space<vmem>>, vector<16x8xf32>,
    } else {
    }
    %c0 = arith.constant 0 : index
    %c0_4 = arith.constant 0 : index
    %8 = vector.load %arg3[%c0, %c0_4] : memref<16x128xf32, #tpu.memory_space<vmem>>, vector<16x128xf32>
    %c0_5 = arith.constant 0 : index
    %c0_6 = arith.constant 0 : index
    %9 = vector.load %arg9[%c0_5, %c0_6] : memref<16x128xf32, #tpu.memory_space<vmem>>, vector<16x128xf32>
    %c0_7 = arith.constant 0 : index
    %c0_8 = arith.constant 0 : index
    %10 = vector.load %arg4[%c0_7, %c0_8] : memref<128x128xf32, #tpu.memory_space<vmem>>, vector<128x128xf32>
    %cst = arith.constant dense<0.000000e+00> : vector<16x128xf32>
    %11 = tpu.matmul %8, %10, %cst {dimension_numbers = #tpu.dot_dimension_numbers<[1], [0], [0], [1], [0, 0, 1, 1], [], []>} : vector<16x128xf32>, vector<128x128xf32>, vector<16x128xf32> -> vector<16x128xf32>
    %12 = arith.addf %9, %11 : vector<16x128xf32>
    %c0_9 = arith.constant 0 : index
    %c0_10 = arith.constant 0 : index
    %13 = vector.load %arg9[%c0_9, %c0_10] : memref<16x128xf32, #tpu.memory_space<vmem>>, vector<16x128xf32>
    tpu.vector_store %arg9[%c0_9, %c0_10], %12 {strides = array<i32>} : memref<16x128xf32, #tpu.memory_space<vmem>>, vector<16x128xf32>,
    %c0_i32_11 = arith.constant 0 : i32
    %14 = arith.cmpi eq, %arg1, %c0_i32_11 : i32
    %15 = arith.extui %14 : i1 to i32
    %c0_i32_12 = arith.constant 0 : i32
    %16 = arith.cmpi ne, %15, %c0_i32_12 : i32
    scf.if %16 {
      %c0_15 = arith.constant 0 : index
      %c0_16 = arith.constant 0 : index
      %20 = vector.load %arg10[%c0_15, %c0_16] : memref<16x8xf32, #tpu.memory_space<vmem>>, vector<16x8xf32>
      %c0_17 = arith.constant 0 : index
      %c0_18 = arith.constant 0 : index
      %21 = vector.load %arg6[%c0_17, %c0_18] : memref<128x8xf32, #tpu.memory_space<vmem>>, vector<128x8xf32>
      %cst_19 = arith.constant dense<0.000000e+00> : vector<16x8xf32>
      %22 = tpu.matmul %8, %21, %cst_19 {dimension_numbers = #tpu.dot_dimension_numbers<[1], [0], [0], [1], [0, 0, 1, 1], [], []>} : vector<16x128xf32>, vector<128x8xf32>, vector<16x8xf32> -> vector<16x8xf32>
      %23 = arith.addf %20, %22 : vector<16x8xf32>
      %c0_20 = arith.constant 0 : index
      %c0_21 = arith.constant 0 : index
      %24 = vector.load %arg10[%c0_20, %c0_21] : memref<16x8xf32, #tpu.memory_space<vmem>>, vector<16x8xf32>
      tpu.vector_store %arg10[%c0_20, %c0_21], %23 {strides = array<i32>} : memref<16x8xf32, #tpu.memory_space<vmem>>, vector<16x8xf32>,
    } else {
    }
    %c0_i32_13 = arith.constant 0 : i32
    %17 = arith.cmpi eq, %arg2, %c0_i32_13 : i32
    %18 = arith.extui %17 : i1 to i32
    %c0_i32_14 = arith.constant 0 : i32
    %19 = arith.cmpi ne, %18, %c0_i32_14 : i32
    scf.if %19 {
      %c0_15 = arith.constant 0 : index
      %c0_16 = arith.constant 0 : index
      %20 = vector.load %arg10[%c0_15, %c0_16] : memref<16x8xf32, #tpu.memory_space<vmem>>, vector<16x8xf32>
      %c0_17 = arith.constant 0 : index
      %c0_18 = arith.constant 0 : index
      %21 = vector.load %arg7[%c0_17, %c0_18] : memref<8x128xf32, #tpu.memory_space<vmem>>, vector<8x128xf32>
      %cst_19 = arith.constant dense<0.000000e+00> : vector<16x128xf32>
      %22 = tpu.matmul %20, %21, %cst_19 {dimension_numbers = #tpu.dot_dimension_numbers<[1], [0], [0], [1], [0, 0, 1, 1], [], []>} : vector<16x8xf32>, vector<8x128xf32>, vector<16x128xf32> -> vector<16x128xf32>
      %c0_20 = arith.constant 0 : index
      %c0_21 = arith.constant 0 : index
      %23 = vector.load %arg9[%c0_20, %c0_21] : memref<16x128xf32, #tpu.memory_space<vmem>>, vector<16x128xf32>
      %24 = arith.addf %23, %22 : vector<16x128xf32>
      %c0_22 = arith.constant 0 : index
      %c0_23 = arith.constant 0 : index
      %25 = vector.load %arg8[%c0_22, %c0_23] : memref<16x128xf32, #tpu.memory_space<vmem>>, vector<16x128xf32>
      tpu.vector_store %arg8[%c0_22, %c0_23], %24 {strides = array<i32>} : memref<16x128xf32, #tpu.memory_space<vmem>>, vector<16x128xf32>,
    } else {
    }
    return
  }
  func.func @transform_0(%arg0: i32, %arg1: i32, %arg2: i32) -> (i32, i32) {
    %c0_i32 = arith.constant 0 : i32
    return %arg0, %arg2 : i32, i32
  }
  func.func @transform_1(%arg0: i32, %arg1: i32, %arg2: i32) -> (i32, i32) {
    %c0_i32 = arith.constant 0 : i32
    return %arg2, %arg1 : i32, i32
  }
  func.func @transform_2(%arg0: i32, %arg1: i32, %arg2: i32) -> (i32, i32) {
    %c0_i32 = arith.constant 0 : i32
    %c0_i32_0 = arith.constant 0 : i32
    return %c0_i32, %arg1 : i32, i32
  }
  func.func @transform_3(%arg0: i32, %arg1: i32, %arg2: i32) -> (i32, i32) {
    %c0_i32 = arith.constant 0 : i32
    %c0_i32_0 = arith.constant 0 : i32
    return %arg2, %c0_i32 : i32, i32
  }
  func.func @transform_4(%arg0: i32, %arg1: i32, %arg2: i32) -> (i32, i32) {
    %c0_i32 = arith.constant 0 : i32
    %c0_i32_0 = arith.constant 0 : i32
    return %c0_i32, %arg1 : i32, i32
  }
  func.func @transform_5(%arg0: i32, %arg1: i32, %arg2: i32) -> (i32, i32) {
    %c0_i32 = arith.constant 0 : i32
    return %arg0, %arg1 : i32, i32
  }
}

</mosaic_0001>

<llo_original>
// kernel: tpu_custom_call.1
$region0: #{tpu_custom_call.1}
  #allocation0 [shape = 'u32[]', space=smem, size = 0x4, offset = 0x4, fixed_abs, tag = 'smem constant byte address 0x4 - core index']
  #allocation1 [shape = 'u32[144,128]{1,0:T(1,128)}', space=vmem, size = 0x12000, scoped, tag = 'internal scratch']
  #allocation2 [shape = 'f32[16,128]{1,0:T(8,128)}', space=vmem, size = 0x2000, scoped, tag = 'scratch operand']
  #allocation3 [shape = 'f32[16,8]{1,0:T(8,128)}', space=vmem, size = 0x2000, scoped, tag = 'scratch operand']
  %s0 = inlined_call_operand.hbm [shape: f32[16,128], index: 0, kind: input, shape index: {}]
  %s1 = inlined_call_operand.vmem [shape: f32[128,128], index: 1, kind: input, shape index: {}]
  %s2 = inlined_call_operand.vmem [shape: f32[1,128], index: 2, kind: input, shape index: {}]
  %s3 = inlined_call_operand.vmem [shape: f32[128,8], index: 3, kind: input, shape index: {}]
  %s4 = inlined_call_operand.vmem [shape: f32[8,128], index: 4, kind: input, shape index: {}]
  %s5 = inlined_call_operand.hbm [shape: f32[16,128], index: 5, kind: output, shape index: {}]
  %s6 = sld [smem:[#allocation0]]
  $region50: #{tpu_custom_call.1} parent=0
    _
  %s8 = ssub.s32 1, %s6
  %s9 = scalar_select 0, %s8, %s6
  $region1: #{tpu_custom_call.1} parent=0
    #allocation4 [shape = 'u8[8192]{0}', space=vmem, size = 0x2000, scoped, tag = 'input window, operand 0, single buffered']
    #allocation5 [shape = 's32[1]{0}', space=sflag, size = 0x4, scoped, tag = 'scoped memory for tpu_custom_call.1']
    #allocation6 [shape = 's32[1]{0}', space=sflag, size = 0x4, scoped, tag = 'scoped memory for tpu_custom_call.1']
    #allocation7 [shape = 'u8[8192]{0}', space=vmem, size = 0x2000, scoped, tag = 'output window, operand 0, single buffered']
    %10 = vsyncpa [#allocation5], 0
    %11 = vsyncpa [#allocation6], 0
    // Predicated region
    $region2: #{tpu_custom_call.1} parent=1 // pred_check
      _
    $region3: #{tpu_custom_call.1} parent=1 // pred_check_branch
      %13 = sbr.rel (0) target = $region5
    $region4: #{tpu_custom_call.1} parent=1 // pred_region
      %s15 = ssub.s32 256, 256
      %16 = vsyncadd [#allocation5], %s15
      %s17 = sshll.u32 [#allocation4], 4
      %s18 = int_to_ptr.vmem [resolvable:$true] %s17
      %23 = dma.hbm_to_vmem [thread:$0]  %s0, 256, %s18, [#allocation5], 128, 128, 8
    $region5: #{tpu_custom_call.1} parent=1 // pred_fallthru
      _
    // Predicated region
    $region6: #{tpu_custom_call.1} parent=1 // pred_check
      _
    $region7: #{tpu_custom_call.1} parent=1 // pred_check_branch
      %25 = sbr.rel (0) target = $region9
    $region8: #{tpu_custom_call.1} parent=1 // pred_region
      _
    $region9: #{tpu_custom_call.1} parent=1 // pred_fallthru
      _
    // Predicated region
    $region10: #{tpu_custom_call.1} parent=1 // pred_check
      _
    $region11: #{tpu_custom_call.1} parent=1 // pred_check_branch
      %27 = sbr.rel (0) target = $region13
    $region12: #{tpu_custom_call.1} parent=1 // pred_region
      _
    $region13: #{tpu_custom_call.1} parent=1 // pred_fallthru
      _
    // Predicated region
    $region14: #{tpu_custom_call.1} parent=1 // pred_check
      _
    $region15: #{tpu_custom_call.1} parent=1 // pred_check_branch
      %29 = sbr.rel (0) target = $region17
    $region16: #{tpu_custom_call.1} parent=1 // pred_region
      _
    $region17: #{tpu_custom_call.1} parent=1 // pred_fallthru
      _
    // Predicated region
    $region18: #{tpu_custom_call.1} parent=1 // pred_check
      _
    $region19: #{tpu_custom_call.1} parent=1 // pred_check_branch
      %31 = sbr.rel (0) target = $region21
    $region20: #{tpu_custom_call.1} parent=1 // pred_region
      _
    $region21: #{tpu_custom_call.1} parent=1 // pred_fallthru
      _
    // Predicated region
    $region22: #{tpu_custom_call.1} parent=1 // pred_check
      _
    $region23: #{tpu_custom_call.1} parent=1 // pred_check_branch
      %33 = sbr.rel (0) target = $region25
    $region24: #{tpu_custom_call.1} parent=1 // pred_region
      %34 = dma.done [#allocation5], 256
    $region25: #{tpu_custom_call.1} parent=1 // pred_fallthru
      _
    %p35 = scmp.eq.s32.totalorder 0, 0
    // Predicated region
    $region26: #{tpu_custom_call.1} parent=1 // pred_check
      %p36 = pneg %p35
    $region27: #{tpu_custom_call.1} parent=1 // pred_check_branch
      %38 = sbr.rel (%p36) target = $region29
    $region28: #{tpu_custom_call.1} parent=1 // pred_region
      %v39 = vld [vmem:[%s2] sm:$0x1]
      %v41 = vlaneseq
      %v42 = vshrl.u32 %v41, 7
      %v43 = vsub.s32 0, %v42
      %v44 = vrot.slane %v39, %v43
      %46 = vst [vmem:[#allocation2] sm:$0xff] %v44
      %47 = vst [vmem:[#allocation2 + $0x8] sm:$0xff] %v44
    $region29: #{tpu_custom_call.1} parent=1 // pred_fallthru
      _
    %p48 = scmp.eq.s32.totalorder 0, 0
    %p49 = pnand %p48, %p35
    %p50 = pneg %p49
    // Predicated region
    $region30: #{tpu_custom_call.1} parent=1 // pred_check
      _
    $region31: #{tpu_custom_call.1} parent=1 // pred_check_branch
      %52 = sbr.rel (%p49) target = $region33
    $region32: #{tpu_custom_call.1} parent=1 // pred_region
      %vm53 = vcmask 64512
      %54 = vst.msk [vmem:[#allocation3] sm:$0xff] %vm53, 0.0
      %55 = vst.msk [vmem:[#allocation3 + $0x8] sm:$0xff] %vm53, 0.0
    $region33: #{tpu_custom_call.1} parent=1 // pred_fallthru
      _
    %v56 = vld [vmem:[#allocation4] sm:$0xff]
    %v57 = vld [vmem:[#allocation4 + $0x8] sm:$0xff]
    %v58 = vld [vmem:[#allocation2] sm:$0xff]
    %v59 = vld [vmem:[#allocation2 + $0x8] sm:$0xff]
    %v60 = vld [vmem:[%s1] sm:$0xff]
    %v61 = vld [vmem:[%s1 + $0x8] sm:$0xff]
    %v62 = vld [vmem:[%s1 + $0x10] sm:$0xff]
    %v63 = vld [vmem:[%s1 + $0x18] sm:$0xff]
    %v64 = vld [vmem:[%s1 + $0x20] sm:$0xff]
    %v65 = vld [vmem:[%s1 + $0x28] sm:$0xff]
    %v66 = vld [vmem:[%s1 + $0x30] sm:$0xff]
    %v67 = vld [vmem:[%s1 + $0x38] sm:$0xff]
    %v68 = vld [vmem:[%s1 + $0x40] sm:$0xff]
    %v69 = vld [vmem:[%s1 + $0x48] sm:$0xff]
    %v70 = vld [vmem:[%s1 + $0x50] sm:$0xff]
    %v71 = vld [vmem:[%s1 + $0x58] sm:$0xff]
    %v72 = vld [vmem:[%s1 + $0x60] sm:$0xff]
    %v73 = vld [vmem:[%s1 + $0x68] sm:$0xff]
    %v74 = vld [vmem:[%s1 + $0x70] sm:$0xff]
    %v75 = vld [vmem:[%s1 + $0x78] sm:$0xff]
    %76 = vmatprep.subr.mxu0 0.0
    %77 = vmatpush1.msra.mxu0 %v60
    %78 = vmatprep.subr.mxu0 0.0
    %79 = vmatpush1.msra.mxu0 %v61
    %80 = vmatprep.subr.mxu0 0.0
    %81 = vmatpush1.msra.mxu0 %v62
    %82 = vmatprep.subr.mxu0 0.0
    %83 = vmatpush1.msra.mxu0 %v63
    %84 = vmatprep.subr.mxu0 0.0
    %85 = vmatpush1.msra.mxu0 %v64
    %86 = vmatprep.subr.mxu0 0.0
    %87 = vmatpush1.msra.mxu0 %v65
    %88 = vmatprep.subr.mxu0 0.0
    %89 = vmatpush1.msra.mxu0 %v66
    %90 = vmatprep.subr.mxu0 0.0
    %91 = vmatpush1.msra.mxu0 %v67
    %92 = vmatprep.subr.mxu0 0.0
    %93 = vmatpush1.msra.mxu0 %v68
    %94 = vmatprep.subr.mxu0 0.0
    %95 = vmatpush1.msra.mxu0 %v69
    %96 = vmatprep.subr.mxu0 0.0
    %97 = vmatpush1.msra.mxu0 %v70
    %98 = vmatprep.subr.mxu0 0.0
    %99 = vmatpush1.msra.mxu0 %v71
    %100 = vmatprep.subr.mxu0 0.0
    %101 = vmatpush1.msra.mxu0 %v72
    %102 = vmatprep.subr.mxu0 0.0
    %103 = vmatpush1.msra.mxu0 %v73
    %104 = vmatprep.subr.mxu0 0.0
    %105 = vmatpush1.msra.mxu0 %v74
    %106 = vmatprep.subr.mxu0 0.0
    %107 = vmatpush1.msra.mxu0 %v75
    %108 = vmatprep.subr.mxu0 0.0
    %109 = vmatpush1.msra.mxu0 0.0
    %110 = vmatprep.subr.mxu0 0.0
    %111 = vmatpush1.msra.mxu0 0.0
    %112 = vmatprep.subr.mxu0 0.0
    %113 = vmatpush1.msra.mxu0 0.0
    %114 = vmatprep.subr.mxu0 0.0
    %115 = vmatpush1.msra.mxu0 0.0
    %116 = vmatprep.subr.mxu0 0.0
    %117 = vmatpush1.msra.mxu0 0.0
    %118 = vmatprep.subr.mxu0 0.0
    %119 = vmatpush1.msra.mxu0 0.0
    %120 = vmatprep.subr.mxu0 0.0
    %121 = vmatpush1.msra.mxu0 0.0
    %122 = vmatprep.subr.mxu0 0.0
    %123 = vmatpush1.msra.mxu0 0.0
    %124 = vmatprep.subr.mxu0 0.0
    %125 = vmatpush1.msra.mxu0 0.0
    %126 = vmatprep.subr.mxu0 0.0
    %127 = vmatpush1.msra.mxu0 0.0
    %128 = vmatprep.subr.mxu0 0.0
    %129 = vmatpush1.msra.mxu0 0.0
    %130 = vmatprep.subr.mxu0 0.0
    %131 = vmatpush1.msra.mxu0 0.0
    %132 = vmatprep.subr.mxu0 0.0
    %133 = vmatpush1.msra.mxu0 0.0
    %134 = vmatprep.subr.mxu0 0.0
    %135 = vmatpush1.msra.mxu0 0.0
    %136 = vmatprep.subr.mxu0 0.0
    %137 = vmatpush1.msra.mxu0 0.0
    %138 = vmatprep.subr.mxu0 0.0
    %139 = vmatpush1.msra.mxu0 0.0
    %140 = vmatprep.mubr.f32.mxu0 0.0
    %141 = vmatmul.mubr.f32.gmra.mrb[0].mxu0 %v56
    %v142 = vpop.f32.mrb[0].mxu0
    %v143 = vadd.f32 0.0, %v142
    %v144 = vpop.f32.mrb[0].mxu0
    %145 = vmatprep.mubr.f32.mxu0 0.0
    %146 = vmatmul.mubr.f32.gmra.mrb[0].mxu0 %v57
    %v147 = vpop.f32.mrb[0].mxu0
    %v148 = vadd.f32 0.0, %v147
    %v149 = vpop.f32.mrb[0].mxu0
    %150 = vdwg.mxu0
    %v151 = vadd.f32 %v58, %v143
    %v152 = vadd.f32 %v59, %v148
    %153 = vst [vmem:[#allocation2] sm:$0xff] %v151
    %154 = vst [vmem:[#allocation2 + $0x8] sm:$0xff] %v152
    // Predicated region
    $region34: #{tpu_custom_call.1} parent=1 // pred_check
      %p155 = pneg %p48
    $region35: #{tpu_custom_call.1} parent=1 // pred_check_branch
      %157 = sbr.rel (%p155) target = $region37
    $region36: #{tpu_custom_call.1} parent=1 // pred_region
      %v158 = vld [vmem:[#allocation3] sm:$0xff]
      %v159 = vld [vmem:[#allocation3 + $0x8] sm:$0xff]
      %v160 = vld [vmem:[%s3] sm:$0xff]
      %v161 = vld [vmem:[%s3 + $0x8] sm:$0xff]
      %v162 = vld [vmem:[%s3 + $0x10] sm:$0xff]
      %v163 = vld [vmem:[%s3 + $0x18] sm:$0xff]
      %v164 = vld [vmem:[%s3 + $0x20] sm:$0xff]
      %v165 = vld [vmem:[%s3 + $0x28] sm:$0xff]
      %v166 = vld [vmem:[%s3 + $0x30] sm:$0xff]
      %v167 = vld [vmem:[%s3 + $0x38] sm:$0xff]
      %v168 = vld [vmem:[%s3 + $0x40] sm:$0xff]
      %v169 = vld [vmem:[%s3 + $0x48] sm:$0xff]
      %v170 = vld [vmem:[%s3 + $0x50] sm:$0xff]
      %v171 = vld [vmem:[%s3 + $0x58] sm:$0xff]
      %v172 = vld [vmem:[%s3 + $0x60] sm:$0xff]
      %v173 = vld [vmem:[%s3 + $0x68] sm:$0xff]
      %v174 = vld [vmem:[%s3 + $0x70] sm:$0xff]
      %v175 = vld [vmem:[%s3 + $0x78] sm:$0xff]
      %176 = vmatprep.subr.mxu0 0.0
      %177 = vmatpush1.msra.mxu0 %v160
      %178 = vmatprep.subr.mxu0 0.0
      %179 = vmatpush1.msra.mxu0 %v161
      %180 = vmatprep.subr.mxu0 0.0
      %181 = vmatpush1.msra.mxu0 %v162
      %182 = vmatprep.subr.mxu0 0.0
      %183 = vmatpush1.msra.mxu0 %v163
      %184 = vmatprep.subr.mxu0 0.0
      %185 = vmatpush1.msra.mxu0 %v164
      %186 = vmatprep.subr.mxu0 0.0
      %187 = vmatpush1.msra.mxu0 %v165
      %188 = vmatprep.subr.mxu0 0.0
      %189 = vmatpush1.msra.mxu0 %v166
      %190 = vmatprep.subr.mxu0 0.0
      %191 = vmatpush1.msra.mxu0 %v167
      %192 = vmatprep.subr.mxu0 0.0
      %193 = vmatpush1.msra.mxu0 %v168
      %194 = vmatprep.subr.mxu0 0.0
      %195 = vmatpush1.msra.mxu0 %v169
      %196 = vmatprep.subr.mxu0 0.0
      %197 = vmatpush1.msra.mxu0 %v170
      %198 = vmatprep.subr.mxu0 0.0
      %199 = vmatpush1.msra.mxu0 %v171
      %200 = vmatprep.subr.mxu0 0.0
      %201 = vmatpush1.msra.mxu0 %v172
      %202 = vmatprep.subr.mxu0 0.0
      %203 = vmatpush1.msra.mxu0 %v173
      %204 = vmatprep.subr.mxu0 0.0
      %205 = vmatpush1.msra.mxu0 %v174
      %206 = vmatprep.subr.mxu0 0.0
      %207 = vmatpush1.msra.mxu0 %v175
      %208 = vmatprep.subr.mxu0 0.0
      %209 = vmatpush1.msra.mxu0 0.0
      %210 = vmatprep.subr.mxu0 0.0
      %211 = vmatpush1.msra.mxu0 0.0
      %212 = vmatprep.subr.mxu0 0.0
      %213 = vmatpush1.msra.mxu0 0.0
      %214 = vmatprep.subr.mxu0 0.0
      %215 = vmatpush1.msra.mxu0 0.0
      %216 = vmatprep.subr.mxu0 0.0
      %217 = vmatpush1.msra.mxu0 0.0
      %218 = vmatprep.subr.mxu0 0.0
      %219 = vmatpush1.msra.mxu0 0.0
      %220 = vmatprep.subr.mxu0 0.0
      %221 = vmatpush1.msra.mxu0 0.0
      %222 = vmatprep.subr.mxu0 0.0
      %223 = vmatpush1.msra.mxu0 0.0
      %224 = vmatprep.subr.mxu0 0.0
      %225 = vmatpush1.msra.mxu0 0.0
      %226 = vmatprep.subr.mxu0 0.0
      %227 = vmatpush1.msra.mxu0 0.0
      %228 = vmatprep.subr.mxu0 0.0
      %229 = vmatpush1.msra.mxu0 0.0
      %230 = vmatprep.subr.mxu0 0.0
      %231 = vmatpush1.msra.mxu0 0.0
      %232 = vmatprep.subr.mxu0 0.0
      %233 = vmatpush1.msra.mxu0 0.0
      %234 = vmatprep.subr.mxu0 0.0
      %235 = vmatpush1.msra.mxu0 0.0
      %236 = vmatprep.subr.mxu0 0.0
      %237 = vmatpush1.msra.mxu0 0.0
      %238 = vmatprep.subr.mxu0 0.0
      %239 = vmatpush1.msra.mxu0 0.0
      %240 = vmatprep.mubr.f32.mxu0 0.0
      %241 = vmatmul.mubr.f32.gmra.mrb[0].mxu0 %v56
      %v242 = vpop.f32.mrb[0].mxu0
      %v243 = vadd.f32 0.0, %v242
      %v244 = vpop.f32.mrb[0].mxu0
      %245 = vmatprep.mubr.f32.mxu0 0.0
      %246 = vmatmul.mubr.f32.gmra.mrb[0].mxu0 %v57
      %v247 = vpop.f32.mrb[0].mxu0
      %v248 = vadd.f32 0.0, %v247
      %v249 = vpop.f32.mrb[0].mxu0
      %250 = vdwg.mxu0
      %v251 = vadd.f32 %v158, %v243
      %v252 = vadd.f32 %v159, %v248
      %vm253 = vcmask 64512
      %254 = vst.msk [vmem:[#allocation3] sm:$0xff] %vm253, %v251
      %255 = vst.msk [vmem:[#allocation3 + $0x8] sm:$0xff] %vm253, %v252
    $region37: #{tpu_custom_call.1} parent=1 // pred_fallthru
      _
    // Predicated region
    $region38: #{tpu_custom_call.1} parent=1 // pred_check
      %p256 = pneg %p35
    $region39: #{tpu_custom_call.1} parent=1 // pred_check_branch
      %258 = sbr.rel (%p256) target = $region41
    $region40: #{tpu_custom_call.1} parent=1 // pred_region
      %v259 = vld [vmem:[#allocation3] sm:$0xff]
      %v260 = vld [vmem:[#allocation3 + $0x8] sm:$0xff]
      %v261 = vld [vmem:[%s4] sm:$0xff]
      %vm262 = vcmask 64512
      %v264 = vsel %vm262, %v259, 0
      %v267 = vsel %vm262, %v260, 0
      %269 = vmatprep.subr.mxu0 0.0
      %270 = vmatpush1.msra.mxu0 %v261
      %271 = vmatprep.subr.mxu0 0.0
      %272 = vmatpush1.msra.mxu0 0.0
      %273 = vmatprep.subr.mxu0 0.0
      %274 = vmatpush1.msra.mxu0 0.0
      %275 = vmatprep.subr.mxu0 0.0
      %276 = vmatpush1.msra.mxu0 0.0
      %277 = vmatprep.subr.mxu0 0.0
      %278 = vmatpush1.msra.mxu0 0.0
      %279 = vmatprep.subr.mxu0 0.0
      %280 = vmatpush1.msra.mxu0 0.0
      %281 = vmatprep.subr.mxu0 0.0
      %282 = vmatpush1.msra.mxu0 0.0
      %283 = vmatprep.subr.mxu0 0.0
      %284 = vmatpush1.msra.mxu0 0.0
      %285 = vmatprep.subr.mxu0 0.0
      %286 = vmatpush1.msra.mxu0 0.0
      %287 = vmatprep.subr.mxu0 0.0
      %288 = vmatpush1.msra.mxu0 0.0
      %289 = vmatprep.subr.mxu0 0.0
      %290 = vmatpush1.msra.mxu0 0.0
      %291 = vmatprep.subr.mxu0 0.0
      %292 = vmatpush1.msra.mxu0 0.0
      %293 = vmatprep.subr.mxu0 0.0
      %294 = vmatpush1.msra.mxu0 0.0
      %295 = vmatprep.subr.mxu0 0.0
      %296 = vmatpush1.msra.mxu0 0.0
      %297 = vmatprep.subr.mxu0 0.0
      %298 = vmatpush1.msra.mxu0 0.0
      %299 = vmatprep.subr.mxu0 0.0
      %300 = vmatpush1.msra.mxu0 0.0
      %301 = vmatprep.subr.mxu0 0.0
      %302 = vmatpush1.msra.mxu0 0.0
      %303 = vmatprep.subr.mxu0 0.0
      %304 = vmatpush1.msra.mxu0 0.0
      %305 = vmatprep.subr.mxu0 0.0
      %306 = vmatpush1.msra.mxu0 0.0
      %307 = vmatprep.subr.mxu0 0.0
      %308 = vmatpush1.msra.mxu0 0.0
      %309 = vmatprep.subr.mxu0 0.0
      %310 = vmatpush1.msra.mxu0 0.0
      %311 = vmatprep.subr.mxu0 0.0
      %312 = vmatpush1.msra.mxu0 0.0
      %313 = vmatprep.subr.mxu0 0.0
      %314 = vmatpush1.msra.mxu0 0.0
      %315 = vmatprep.subr.mxu0 0.0
      %316 = vmatpush1.msra.mxu0 0.0
      %317 = vmatprep.subr.mxu0 0.0
      %318 = vmatpush1.msra.mxu0 0.0
      %319 = vmatprep.subr.mxu0 0.0
      %320 = vmatpush1.msra.mxu0 0.0
      %321 = vmatprep.subr.mxu0 0.0
      %322 = vmatpush1.msra.mxu0 0.0
      %323 = vmatprep.subr.mxu0 0.0
      %324 = vmatpush1.msra.mxu0 0.0
      %325 = vmatprep.subr.mxu0 0.0
      %326 = vmatpush1.msra.mxu0 0.0
      %327 = vmatprep.subr.mxu0 0.0
      %328 = vmatpush1.msra.mxu0 0.0
      %329 = vmatprep.subr.mxu0 0.0
      %330 = vmatpush1.msra.mxu0 0.0
      %331 = vmatprep.subr.mxu0 0.0
      %332 = vmatpush1.msra.mxu0 0.0
      %333 = vmatprep.mubr.f32.mxu0 0.0
      %334 = vmatmul.mubr.f32.gmra.mrb[0].mxu0 %v264
      %v335 = vpop.f32.mrb[0].mxu0
      %v336 = vadd.f32 0.0, %v335
      %v337 = vpop.f32.mrb[0].mxu0
      %338 = vmatprep.mubr.f32.mxu0 0.0
      %339 = vmatmul.mubr.f32.gmra.mrb[0].mxu0 %v267
      %v340 = vpop.f32.mrb[0].mxu0
      %v341 = vadd.f32 0.0, %v340
      %v342 = vpop.f32.mrb[0].mxu0
      %343 = vdwg.mxu0
      %v344 = vld [vmem:[#allocation2] sm:$0xff]
      %v345 = vld [vmem:[#allocation2 + $0x8] sm:$0xff]
      %v346 = vadd.f32 %v344, %v336
      %v347 = vadd.f32 %v345, %v341
      %348 = vst [vmem:[#allocation7] sm:$0xff] %v346
      %349 = vst [vmem:[#allocation7 + $0x8] sm:$0xff] %v347
    $region41: #{tpu_custom_call.1} parent=1 // pred_fallthru
      _
    // Predicated region
    $region42: #{tpu_custom_call.1} parent=1 // pred_check
      _
    $region43: #{tpu_custom_call.1} parent=1 // pred_check_branch
      %351 = sbr.rel (0) target = $region45
    $region44: #{tpu_custom_call.1} parent=1 // pred_region
      %s353 = ssub.s32 256, 256
      %354 = vsyncadd [#allocation6], %s353
      %s355 = sshll.u32 [#allocation7], 4
      %s356 = int_to_ptr.vmem [resolvable:$true] %s355
      %361 = dma.vmem_to_hbm [thread:$0]  %s356, 256, %s5, [#allocation6], 128, 128, 8
    $region45: #{tpu_custom_call.1} parent=1 // pred_fallthru
      _
    // Predicated region
    $region46: #{tpu_custom_call.1} parent=1 // pred_check
      _
    $region47: #{tpu_custom_call.1} parent=1 // pred_check_branch
      %363 = sbr.rel (0) target = $region49
    $region48: #{tpu_custom_call.1} parent=1 // pred_region
      %364 = dma.done [#allocation6], 256
    $region49: #{tpu_custom_call.1} parent=1 // pred_fallthru
      _
    %365 = vsyncpa [#allocation5], 1
    %366 = vsyncpa [#allocation6], 1

</llo_original>
